<compile_context>
chip_gen: v7x
topology: tpu7x:2x2x1
jax: 0.10.0
libtpu: 0.0.40
codegen_flags: <defaults>
</compile_context>

<pallas_src>
import jax
import jax.numpy as jnp
from jax.experimental import pallas as pl
from jax.experimental.pallas import tpu as pltpu


def _cross_attn_kernel(g_ref, t_ref,
                       wq_ref, bq_ref,
                       wkv_ref, bkv_ref,
                       wo_ref, bo_ref,
                       out_ref):
    bb, bq_len, H = g_ref.shape          # (batch tile, query tile, hidden)
    _, sk, _ = t_ref.shape               # (batch tile, key/value len, hidden)

    cdt = wq_ref.dtype                   # bf16 compute dtype for MXU operands

    # Fold (batch, seq) into one M dimension for the projections; the merge is
    # layout-compatible (second-minor dim stays a multiple of 8 sublanes).
    g2 = g_ref[...].reshape(bb * bq_len, H).astype(cdt)
    t2 = t_ref[...].reshape(bb * sk, H).astype(cdt)

    # Q projection. Weights arrive pre-transposed ([H_in, H_out]): no .T here.
    q = jnp.dot(g2, wq_ref[...], preferred_element_type=jnp.float32) + bq_ref[...]
    # Fused K/V projection: one (H, 2H) matmul instead of two (H, H) ones.
    kv = jnp.dot(t2, wkv_ref[...], preferred_element_type=jnp.float32) + bkv_ref[...]

    q = q.reshape(bb, bq_len, H)
    kv = kv.reshape(bb, sk, 2 * H)
    k = kv[:, :, :H]
    v = kv[:, :, H:]

    # Attention scores: batched Q @ K^T, contracting on the last dims so no
    # explicit transpose of K is materialized. bf16 operands, f32 accumulation.
    scale = 1.0 / (H ** 0.5)
    scores = jax.lax.dot_general(
        q.astype(cdt), k.astype(cdt),
        dimension_numbers=(((2,), (2,)), ((0,), (0,))),
        preferred_element_type=jnp.float32) * scale

    # Numerically stable softmax, kept in f32 (v5e has no bf16 VPU/EUP).
    # NOTE: the full (bq_len, sk) scores tile is materialized; for long Sk this
    # should become an online-softmax (flash) loop over Sk tiles.
    m = jnp.max(scores, axis=-1, keepdims=True)
    e = jnp.exp(scores - m)
    denom = jnp.sum(e, axis=-1, keepdims=True)
    probs = e * pl.reciprocal(denom, approx=True)

    # Attention dropout: identity (eval mode).

    # Weighted sum of values: batched probs @ V with bf16 operands.
    attended = jax.lax.dot_general(
        probs.astype(cdt), v.astype(cdt),
        dimension_numbers=(((2,), (1,)), ((0,), (0,))),
        preferred_element_type=jnp.float32)

    # Output projection (pre-transposed weight).
    out = jnp.dot(attended.reshape(bb * bq_len, H).astype(cdt), wo_ref[...],
                  preferred_element_type=jnp.float32) + bo_ref[...]
    out_ref[...] = out.reshape(bb, bq_len, H).astype(out_ref.dtype)


def _largest_divisor_at_most(n, cap):
    cap = max(1, min(n, cap))
    for d in range(cap, 0, -1):
        if n % d == 0:
            return d
    return 1


def cross_attention_layer(graph_latents, text_latents, params, *,
                          block_b=None, block_q=None,
                          compute_dtype=jnp.bfloat16):
    """Pallas implementation of CrossAttentionLayer.forward (eval mode).

    graph_latents: (B, Sq, H), text_latents: (B, Sk, H)
    params: dict with wq, bq, wk, bk, wv, bv, wo, bo
            weights (H, H) in PyTorch [out, in] convention, biases (H,).
    """
    B, Sq, H = graph_latents.shape
    Bt_, Sk, Ht_ = text_latents.shape
    assert Bt_ == B and Ht_ == H

    if block_b is None:
        # Pack several batch elements per grid step to amortize the per-step
        # overhead, while keeping >=2 parallel steps when possible so both
        # v7x TensorCores get work.
        block_b = _largest_divisor_at_most(B, max(1, B // 2)) if B > 1 else 1
    if block_q is None:
        # Sq is small for this module; if large, tile it in multiples of 8.
        block_q = Sq
    assert B % block_b == 0 and Sq % block_q == 0

    f32 = jnp.float32
    # Pre-transpose to [H_in, H_out] (kills per-step in-kernel transposes),
    # fuse K/V weights, and cast weights to bf16 for the MXU. Biases stay f32
    # and are added to the f32 accumulator.
    wq_t = params["wq"].T.astype(compute_dtype)
    wkv_t = jnp.concatenate([params["wk"].T, params["wv"].T],
                            axis=1).astype(compute_dtype)       # (H, 2H)
    wo_t = params["wo"].T.astype(compute_dtype)
    bq = params["bq"].reshape(1, H).astype(f32)
    bkv = jnp.concatenate([params["bk"], params["bv"]],
                          axis=0).reshape(1, 2 * H).astype(f32)
    bo = params["bo"].reshape(1, H).astype(f32)

    n_b = B // block_b
    n_q = Sq // block_q

    # Constant index_maps: weights/biases are DMA'd once and reused every step.
    w_sq_spec = pl.BlockSpec((H, H), lambda b, q: (0, 0))
    w_kv_spec = pl.BlockSpec((H, 2 * H), lambda b, q: (0, 0))
    b_sq_spec = pl.BlockSpec((1, H), lambda b, q: (0, 0))
    b_kv_spec = pl.BlockSpec((1, 2 * H), lambda b, q: (0, 0))

    return pl.pallas_call(
        _cross_attn_kernel,
        out_shape=jax.ShapeDtypeStruct((B, Sq, H), graph_latents.dtype),
        grid_spec=pltpu.PrefetchScalarGridSpec(
            num_scalar_prefetch=0,
            grid=(n_b, n_q),
            in_specs=[
                pl.BlockSpec((block_b, block_q, H), lambda b, q: (b, q, 0)),  # graph
                pl.BlockSpec((block_b, Sk, H), lambda b, q: (b, 0, 0)),       # text
                w_sq_spec, b_sq_spec,     # query
                w_kv_spec, b_kv_spec,     # fused key/value
                w_sq_spec, b_sq_spec,     # output
            ],
            out_specs=pl.BlockSpec((block_b, block_q, H), lambda b, q: (b, q, 0)),
        ),
        compiler_params=pltpu.CompilerParams(
            dimension_semantics=("parallel", "parallel"),
            vmem_limit_bytes=32 * 1024 * 1024),
    )(graph_latents, text_latents, wq_t, bq, wkv_t, bkv, wo_t, bo)


def _reference(graph_latents, text_latents, params):
    """Pure-JAX f32 reference for validation."""
    H = graph_latents.shape[-1]
    q = graph_latents @ params["wq"].T + params["bq"]
    k = text_latents @ params["wk"].T + params["bk"]
    v = text_latents @ params["wv"].T + params["bv"]
    scores = jnp.einsum("bqh,bkh->bqk", q, k) / (H ** 0.5)
    probs = jax.nn.softmax(scores, axis=-1)
    attended = jnp.einsum("bqk,bkh->bqh", probs, v)
    return attended @ params["wo"].T + params["bo"]


def _init_params(key, hidden_dim):
    """Deterministic nn.Linear-style init: U(-1/sqrt(H), 1/sqrt(H))."""
    bound = 1.0 / (hidden_dim ** 0.5)
    keys = jax.random.split(key, 8)

    def u(k, shape):
        return jax.random.uniform(k, shape, jnp.float32, -bound, bound)

    return {
        "wq": u(keys[0], (hidden_dim, hidden_dim)), "bq": u(keys[1], (hidden_dim,)),
        "wk": u(keys[2], (hidden_dim, hidden_dim)), "bk": u(keys[3], (hidden_dim,)),
        "wv": u(keys[4], (hidden_dim, hidden_dim)), "bv": u(keys[5], (hidden_dim,)),
        "wo": u(keys[6], (hidden_dim, hidden_dim)), "bo": u(keys[7], (hidden_dim,)),
    }


if __name__ == "__main__":
    B, Sq, Sk, H = 4, 8, 8, 32   # B=4 -> 2 parallel grid steps x 2 batches/step

    root = jax.random.PRNGKey(0)
    k_g, k_t, k_p = jax.random.split(root, 3)

    graph_latents = jax.random.normal(k_g, (B, Sq, H), jnp.float32)
    text_latents = jax.random.normal(k_t, (B, Sk, H), jnp.float32)
    params = _init_params(k_p, H)

    out = cross_attention_layer(graph_latents, text_latents, params)
    out = jax.block_until_ready(out)

    ref = _reference(graph_latents, text_latents, params)
    assert out.shape == (B, Sq, H)
    # bf16 MXU operands with f32 accumulation -> loosened tolerance vs f32 ref.
    assert jnp.allclose(out, ref, atol=2e-2, rtol=2e-2), "mismatch vs reference"

    print("KERNEL_OK")
</pallas_src>

<mosaic_0001>
module attributes {stable_mosaic.version = 11 : i64} {
  func.func @_cross_attn_kernel(%arg0: i32, %arg1: i32, %arg2: memref<2x8x32xf32, #tpu.memory_space<vmem>>, %arg3: memref<2x8x32xf32, #tpu.memory_space<vmem>>, %arg4: memref<32x32xbf16, #tpu.memory_space<vmem>>, %arg5: memref<1x32xf32, #tpu.memory_space<vmem>>, %arg6: memref<32x64xbf16, #tpu.memory_space<vmem>>, %arg7: memref<1x64xf32, #tpu.memory_space<vmem>>, %arg8: memref<32x32xbf16, #tpu.memory_space<vmem>>, %arg9: memref<1x32xf32, #tpu.memory_space<vmem>>, %arg10: memref<2x8x32xf32, #tpu.memory_space<vmem>>) attributes {dimension_semantics = [#tpu.dimension_semantics<parallel>, #tpu.dimension_semantics<parallel>], iteration_bounds = array<i64: 2, 1>, scalar_prefetch = 0 : i64, scratch_operands = 0 : i64, tpu.core_type = #tpu.core_type<tc>, window_params = [{transform_indices = @transform_0, window_bounds = array<i64: 2, 8, 32>}, {transform_indices = @transform_1, window_bounds = array<i64: 2, 8, 32>}, {pipeline_mode = #tpu.pipeline_mode<synchronous>, transform_indices = @transform_2, window_bounds = array<i64: 32, 32>}, {pipeline_mode = #tpu.pipeline_mode<synchronous>, transform_indices = @transform_3, window_bounds = array<i64: 1, 32>}, {pipeline_mode = #tpu.pipeline_mode<synchronous>, transform_indices = @transform_4, window_bounds = array<i64: 32, 64>}, {pipeline_mode = #tpu.pipeline_mode<synchronous>, transform_indices = @transform_5, window_bounds = array<i64: 1, 64>}, {pipeline_mode = #tpu.pipeline_mode<synchronous>, transform_indices = @transform_6, window_bounds = array<i64: 32, 32>}, {pipeline_mode = #tpu.pipeline_mode<synchronous>, transform_indices = @transform_7, window_bounds = array<i64: 1, 32>}, {transform_indices = @transform_8, window_bounds = array<i64: 2, 8, 32>}]} {
    %c0 = arith.constant 0 : index
    %c0_0 = arith.constant 0 : index
    %c0_1 = arith.constant 0 : index
    %0 = vector.load %arg2[%c0, %c0_0, %c0_1] : memref<2x8x32xf32, #tpu.memory_space<vmem>>, vector<2x8x32xf32>
    %1 = vector.shape_cast %0 : vector<2x8x32xf32> to vector<16x32xf32>
    %2 = arith.truncf %1 : vector<16x32xf32> to vector<16x32xbf16>
    %c0_2 = arith.constant 0 : index
    %c0_3 = arith.constant 0 : index
    %c0_4 = arith.constant 0 : index
    %3 = vector.load %arg3[%c0_2, %c0_3, %c0_4] : memref<2x8x32xf32, #tpu.memory_space<vmem>>, vector<2x8x32xf32>
    %4 = vector.shape_cast %3 : vector<2x8x32xf32> to vector<16x32xf32>
    %5 = arith.truncf %4 : vector<16x32xf32> to vector<16x32xbf16>
    %c0_5 = arith.constant 0 : index
    %c0_6 = arith.constant 0 : index
    %6 = vector.load %arg4[%c0_5, %c0_6] : memref<32x32xbf16, #tpu.memory_space<vmem>>, vector<32x32xbf16>
    %cst = arith.constant dense<0.000000e+00> : vector<16x32xf32>
    %7 = tpu.matmul %2, %6, %cst {dimension_numbers = #tpu.dot_dimension_numbers<[1], [0], [0], [1], [0, 0, 1, 1], [], []>} : vector<16x32xbf16>, vector<32x32xbf16>, vector<16x32xf32> -> vector<16x32xf32>
    %c0_7 = arith.constant 0 : index
    %c0_8 = arith.constant 0 : index
    %8 = vector.load %arg5[%c0_7, %c0_8] : memref<1x32xf32, #tpu.memory_space<vmem>>, vector<1x32xf32>
    %9 = vector.broadcast %8 : vector<1x32xf32> to vector<16x32xf32>
    %10 = arith.addf %7, %9 : vector<16x32xf32>
    %c0_9 = arith.constant 0 : index
    %c0_10 = arith.constant 0 : index
    %11 = vector.load %arg6[%c0_9, %c0_10] : memref<32x64xbf16, #tpu.memory_space<vmem>>, vector<32x64xbf16>
    %cst_11 = arith.constant dense<0.000000e+00> : vector<16x64xf32>
    %12 = tpu.matmul %5, %11, %cst_11 {dimension_numbers = #tpu.dot_dimension_numbers<[1], [0], [0], [1], [0, 0, 1, 1], [], []>} : vector<16x32xbf16>, vector<32x64xbf16>, vector<16x64xf32> -> vector<16x64xf32>
    %c0_12 = arith.constant 0 : index
    %c0_13 = arith.constant 0 : index
    %13 = vector.load %arg7[%c0_12, %c0_13] : memref<1x64xf32, #tpu.memory_space<vmem>>, vector<1x64xf32>
    %14 = vector.broadcast %13 : vector<1x64xf32> to vector<16x64xf32>
    %15 = arith.addf %12, %14 : vector<16x64xf32>
    %16 = vector.shape_cast %10 : vector<16x32xf32> to vector<2x8x32xf32>
    %17 = vector.shape_cast %15 : vector<16x64xf32> to vector<2x8x64xf32>
    %18 = vector.extract_strided_slice %17 {offsets = [0, 0, 0], sizes = [2, 8, 32], strides = [1, 1, 1]} : vector<2x8x64xf32> to vector<2x8x32xf32>
    %19 = vector.extract_strided_slice %17 {offsets = [0, 0, 32], sizes = [2, 8, 32], strides = [1, 1, 1]} : vector<2x8x64xf32> to vector<2x8x32xf32>
    %20 = arith.truncf %16 : vector<2x8x32xf32> to vector<2x8x32xbf16>
    %21 = arith.truncf %18 : vector<2x8x32xf32> to vector<2x8x32xbf16>
    %cst_14 = arith.constant dense<0.000000e+00> : vector<2x8x8xf32>
    %22 = tpu.matmul %20, %21, %cst_14 {dimension_numbers = #tpu.dot_dimension_numbers<[2], [2], [1], [1], [0, 0, 0, 1, 1, 1], [0], [0]>} : vector<2x8x32xbf16>, vector<2x8x32xbf16>, vector<2x8x8xf32> -> vector<2x8x8xf32>
    %cst_15 = arith.constant 0.176776692 : f32
    %23 = vector.broadcast %cst_15 : f32 to vector<2x8x8xf32>
    %24 = arith.mulf %22, %23 : vector<2x8x8xf32>
    %cst_16 = arith.constant dense<0xFF800000> : vector<2x8xf32>
    %25 = vector.multi_reduction <maximumf>, %24, %cst_16 [2] : vector<2x8x8xf32> to vector<2x8xf32>
    %26 = vector.shape_cast %25 : vector<2x8xf32> to vector<2x8x1xf32>
    %27 = vector.broadcast %26 : vector<2x8x1xf32> to vector<2x8x8xf32>
    %28 = arith.subf %24, %27 : vector<2x8x8xf32>
    %29 = math.exp %28 : vector<2x8x8xf32>
    %cst_17 = arith.constant dense<0.000000e+00> : vector<2x8xf32>
    %30 = vector.multi_reduction <add>, %29, %cst_17 [2] : vector<2x8x8xf32> to vector<2x8xf32>
    %31 = vector.shape_cast %30 : vector<2x8xf32> to vector<2x8x1xf32>
    %32 = tpu.reciprocal %31 {approx = true} : vector<2x8x1xf32> -> vector<2x8x1xf32>
    %33 = vector.broadcast %32 : vector<2x8x1xf32> to vector<2x8x8xf32>
    %34 = arith.mulf %29, %33 : vector<2x8x8xf32>
    %35 = arith.truncf %34 : vector<2x8x8xf32> to vector<2x8x8xbf16>
    %36 = arith.truncf %19 : vector<2x8x32xf32> to vector<2x8x32xbf16>
    %cst_18 = arith.constant dense<0.000000e+00> : vector<2x8x32xf32>
    %37 = tpu.matmul %35, %36, %cst_18 {dimension_numbers = #tpu.dot_dimension_numbers<[2], [1], [1], [2], [0, 0, 0, 1, 1, 2], [0], [0]>} : vector<2x8x8xbf16>, vector<2x8x32xbf16>, vector<2x8x32xf32> -> vector<2x8x32xf32>
    %38 = vector.shape_cast %37 : vector<2x8x32xf32> to vector<16x32xf32>
    %39 = arith.truncf %38 : vector<16x32xf32> to vector<16x32xbf16>
    %c0_19 = arith.constant 0 : index
    %c0_20 = arith.constant 0 : index
    %40 = vector.load %arg8[%c0_19, %c0_20] : memref<32x32xbf16, #tpu.memory_space<vmem>>, vector<32x32xbf16>
    %cst_21 = arith.constant dense<0.000000e+00> : vector<16x32xf32>
    %41 = tpu.matmul %39, %40, %cst_21 {dimension_numbers = #tpu.dot_dimension_numbers<[1], [0], [0], [1], [0, 0, 1, 1], [], []>} : vector<16x32xbf16>, vector<32x32xbf16>, vector<16x32xf32> -> vector<16x32xf32>
    %c0_22 = arith.constant 0 : index
    %c0_23 = arith.constant 0 : index
    %42 = vector.load %arg9[%c0_22, %c0_23] : memref<1x32xf32, #tpu.memory_space<vmem>>, vector<1x32xf32>
    %43 = vector.broadcast %42 : vector<1x32xf32> to vector<16x32xf32>
    %44 = arith.addf %41, %43 : vector<16x32xf32>
    %45 = vector.shape_cast %44 : vector<16x32xf32> to vector<2x8x32xf32>
    %c0_24 = arith.constant 0 : index
    %c0_25 = arith.constant 0 : index
    %c0_26 = arith.constant 0 : index
    %46 = vector.load %arg10[%c0_24, %c0_25, %c0_26] : memref<2x8x32xf32, #tpu.memory_space<vmem>>, vector<2x8x32xf32>
    tpu.vector_store %arg10[%c0_24, %c0_25, %c0_26], %45 {strides = array<i32>} : memref<2x8x32xf32, #tpu.memory_space<vmem>>, vector<2x8x32xf32>,
    return
  }
  func.func @transform_0(%arg0: i32, %arg1: i32) -> (i32, i32, i32) {
    %c0_i32 = arith.constant 0 : i32
    %c0_i32_0 = arith.constant 0 : i32
    return %arg0, %arg1, %c0_i32 : i32, i32, i32
  }
  func.func @transform_1(%arg0: i32, %arg1: i32) -> (i32, i32, i32) {
    %c0_i32 = arith.constant 0 : i32
    %c0_i32_0 = arith.constant 0 : i32
    %c0_i32_1 = arith.constant 0 : i32
    return %arg0, %c0_i32, %c0_i32_0 : i32, i32, i32
  }
  func.func @transform_2(%arg0: i32, %arg1: i32) -> (i32, i32) {
    %c0_i32 = arith.constant 0 : i32
    %c0_i32_0 = arith.constant 0 : i32
    %c0_i32_1 = arith.constant 0 : i32
    return %c0_i32, %c0_i32_0 : i32, i32
  }
  func.func @transform_3(%arg0: i32, %arg1: i32) -> (i32, i32) {
    %c0_i32 = arith.constant 0 : i32
    %c0_i32_0 = arith.constant 0 : i32
    %c0_i32_1 = arith.constant 0 : i32
    return %c0_i32, %c0_i32_0 : i32, i32
  }
  func.func @transform_4(%arg0: i32, %arg1: i32) -> (i32, i32) {
    %c0_i32 = arith.constant 0 : i32
    %c0_i32_0 = arith.constant 0 : i32
    %c0_i32_1 = arith.constant 0 : i32
    return %c0_i32, %c0_i32_0 : i32, i32
  }
  func.func @transform_5(%arg0: i32, %arg1: i32) -> (i32, i32) {
    %c0_i32 = arith.constant 0 : i32
    %c0_i32_0 = arith.constant 0 : i32
    %c0_i32_1 = arith.constant 0 : i32
    return %c0_i32, %c0_i32_0 : i32, i32
  }
  func.func @transform_6(%arg0: i32, %arg1: i32) -> (i32, i32) {
    %c0_i32 = arith.constant 0 : i32
    %c0_i32_0 = arith.constant 0 : i32
    %c0_i32_1 = arith.constant 0 : i32
    return %c0_i32, %c0_i32_0 : i32, i32
  }
  func.func @transform_7(%arg0: i32, %arg1: i32) -> (i32, i32) {
    %c0_i32 = arith.constant 0 : i32
    %c0_i32_0 = arith.constant 0 : i32
    %c0_i32_1 = arith.constant 0 : i32
    return %c0_i32, %c0_i32_0 : i32, i32
  }
  func.func @transform_8(%arg0: i32, %arg1: i32) -> (i32, i32, i32) {
    %c0_i32 = arith.constant 0 : i32
    %c0_i32_0 = arith.constant 0 : i32
    return %arg0, %arg1, %c0_i32 : i32, i32, i32
  }
}

</mosaic_0001>

<llo_original>
// kernel: tpu_custom_call.1
$region0: #{tpu_custom_call.1}
  #allocation0 [shape = 'u32[]', space=smem, size = 0x4, offset = 0x4, fixed_abs, tag = 'smem constant byte address 0x4 - core index']
  #allocation1 [shape = 'u32[144,128]{1,0:T(1,128)}', space=vmem, size = 0x12000, scoped, tag = 'internal scratch']
  %s0 = inlined_call_operand.hbm [shape: f32[4,8,32], index: 0, kind: input, shape index: {}]
  %s1 = inlined_call_operand.hbm [shape: f32[4,8,32], index: 1, kind: input, shape index: {}]
  %s2 = inlined_call_operand.hbm [shape: bf16[32,32], index: 2, kind: input, shape index: {}]
  %s3 = inlined_call_operand.vmem [shape: f32[1,32], index: 3, kind: input, shape index: {}]
  %s4 = inlined_call_operand.hbm [shape: bf16[32,64], index: 4, kind: input, shape index: {}]
  %s5 = inlined_call_operand.vmem [shape: f32[1,64], index: 5, kind: input, shape index: {}]
  %s6 = inlined_call_operand.vmem [shape: bf16[32,32], index: 6, kind: input, shape index: {}]
  %s7 = inlined_call_operand.vmem [shape: f32[1,32], index: 7, kind: input, shape index: {}]
  %s8 = inlined_call_operand.hbm [shape: f32[4,8,32], index: 8, kind: output, shape index: {}]
  %s9 = sld [smem:[#allocation0]]
  $region81: #{tpu_custom_call.1} parent=0
    _
  %s11 = ssub.s32 1, %s9
  %s12 = scalar_select 0, %s11, %s9
  $region1: #{tpu_custom_call.1} parent=0
    #allocation2 [shape = 'u8[16384]{0}', space=vmem, size = 0x4000, scoped, tag = 'input window, operand 0']
    #allocation3 [shape = 's32[2]{0}', space=sflag, size = 0x8, scoped, tag = 'scoped memory for tpu_custom_call.1']
    #allocation4 [shape = 's32[2]{0}', space=sflag, size = 0x8, scoped, tag = 'scoped memory for tpu_custom_call.1']
    #allocation5 [shape = 'u8[16384]{0}', space=vmem, size = 0x4000, scoped, tag = 'input window, operand 1']
    #allocation6 [shape = 's32[2]{0}', space=sflag, size = 0x8, scoped, tag = 'scoped memory for tpu_custom_call.1']
    #allocation7 [shape = 'u8[8192]{0}', space=vmem, size = 0x2000, scoped, tag = 'input window, operand 2, single buffered']
    #allocation8 [shape = 'u8[8192]{0}', space=vmem, size = 0x2000, scoped, tag = 'input window, operand 4, single buffered']
    #allocation9 [shape = 's32[1]{0}', space=sflag, size = 0x4, scoped, tag = 'scoped memory for tpu_custom_call.1']
    #allocation10 [shape = 'u8[16384]{0}', space=vmem, size = 0x4000, scoped, tag = 'output window, operand 0']
    %13 = vsyncpa [#allocation3], 0
    %s14 = scalar_lea.sflag [#allocation3], 1
    %15 = vsyncpa %s14, 0
    %16 = vsyncpa [#allocation6], 0
    %s17 = scalar_lea.sflag [#allocation6], 1
    %18 = vsyncpa %s17, 0
    %19 = vsyncpa [#allocation9], 0
    %20 = vsyncpa [#allocation4], 0
    %s21 = scalar_lea.sflag [#allocation4], 1
    %22 = vsyncpa %s21, 0
    loop: start=0, step=1, limit=4
    $region2: #{tpu_custom_call.1} parent=1 // loop_pre_header
      _
    $region3: #{tpu_custom_call.1} parent=1 // loop_header
      %s24 = sphi 0, %s28
      %p25 = scmp.ge.s32.totalorder %s24, 4
      %s31 = sphi 0, %s43
      %s32 = sphi 0, %s39
      %s33 = sphi 0, %s31
      %s34 = sphi 0, %s32
      %s35 = sphi 0, %s33
      %s36 = sphi 0, %s34
      %s48 = sphi 0, %s50
      %s51 = sphi 0, %s48
      %s52 = sphi 0, %s51
      %s68 = sphi 0, %s52
      %s74 = sphi 0, %s76
      %s77 = sphi 0, %s74
      %s78 = sphi 0, %s77
      %s94 = sphi 0, %s78
      %s98 = sphi 0, %s98
      %s100 = sphi 0, %s98
      %s101 = sphi 0, %s100
      %s115 = sphi 0, %s101
      %s119 = sphi 0, %s119
      %s121 = sphi 0, %s119
      %s122 = sphi 0, %s121
      %s136 = sphi 0, %s122
      %s140 = sphi 0, %s140
      %s142 = sphi 0, %s140
      %s143 = sphi 0, %s142
      %s157 = sphi 0, %s143
      %s161 = sphi 0, %s161
      %s163 = sphi 0, %s161
      %s164 = sphi 0, %s163
      %s178 = sphi 0, %s164
      %s182 = sphi 0, %s182
      %s184 = sphi 0, %s182
      %s185 = sphi 0, %s184
      %s199 = sphi 0, %s185
      %s203 = sphi 0, %s203
      %s205 = sphi 0, %s203
      %s206 = sphi 0, %s205
      %s220 = sphi 0, %s206
      %s228 = sphi 0, %s230
      %s231 = sphi 0, %s228
      %s232 = sphi 0, %s231
      %s248 = sphi 0, %s232
    $region4: #{tpu_custom_call.1} parent=1 // loop_header_branch
      %27 = sbr.rel (%p25) target = $region8
    $region5: #{tpu_custom_call.1} parent=1 // loop_body
      %s29 = ssub.s32 %s24, 1
      %s30 = ssub.s32 %s24, 2
      %s37 = sadd.s32 1, %s32
      %p38 = scmp.ge.s32.totalorder %s37, 1
      %s39 = scalar_select %p38, 0, %s37
      %s40 = sadd.s32 1, %s31
      %s41 = scalar_select %p38, %s40, %s31
      %p42 = scmp.ge.s32.totalorder %s41, 2
      %s43 = scalar_select %p42, 0, %s41
      %s44 = ssub.s32 %s31, %s43
      %s45 = ssub.s32 %s32, %s39
      %s46 = sor.u32 %s44, %s45
      %p47 = scmp.eq.s32.totalorder %s46, 0
      %s49 = sadd.s32 %s48, 1
      %s50 = scalar_select %p47, %s48, %s49
      %p53 = pneg %p47
      %p54 = scmp.eq.s32.totalorder %s24, 1
      %p55 = por %p53, %p54
      %p56 = scmp.ne.s32.totalorder %s48, %s51
      %p57 = scmp.eq.s32.totalorder %s24, 0
      %p58 = por %p56, %p57
      %p59 = scmp.ne.s32.totalorder %s48, %s51
      %p60 = scmp.eq.s32.totalorder %s29, 1
      %p61 = por %p59, %p60
      %p62 = scmp.ne.s32.totalorder %s51, %s52
      %p63 = scmp.eq.s32.totalorder %s29, 0
      %p64 = por %p62, %p63
      %p65 = scmp.ne.s32.totalorder %s51, %s52
      %p66 = scmp.eq.s32.totalorder %s30, 1
      %p67 = por %p65, %p66
      %p69 = scmp.ne.s32.totalorder %s52, %s68
      %p70 = scmp.eq.s32.totalorder %s30, 0
      %p71 = por %p69, %p70
      %s72 = ssub.s32 %s31, %s43
      %p73 = scmp.eq.s32.totalorder %s72, 0
      %s75 = sadd.s32 %s74, 1
      %s76 = scalar_select %p73, %s74, %s75
      %p79 = pneg %p73
      %p80 = scmp.eq.s32.totalorder %s24, 1
      %p81 = por %p79, %p80
      %p82 = scmp.ne.s32.totalorder %s74, %s77
      %p83 = scmp.eq.s32.totalorder %s24, 0
      %p84 = por %p82, %p83
      %p85 = scmp.ne.s32.totalorder %s74, %s77
      %p86 = scmp.eq.s32.totalorder %s29, 1
      %p87 = por %p85, %p86
      %p88 = scmp.ne.s32.totalorder %s77, %s78
      %p89 = scmp.eq.s32.totalorder %s29, 0
      %p90 = por %p88, %p89
      %p91 = scmp.ne.s32.totalorder %s77, %s78
      %p92 = scmp.eq.s32.totalorder %s30, 1
      %p93 = por %p91, %p92
      %p95 = scmp.ne.s32.totalorder %s78, %s94
      %p96 = scmp.eq.s32.totalorder %s30, 0
      %p97 = por %p95, %p96
      %s99 = sadd.s32 %s98, 1
      %p102 = scmp.eq.s32.totalorder %s24, 1
      %p103 = scmp.ne.s32.totalorder %s98, %s100
      %p104 = scmp.eq.s32.totalorder %s24, 0
      %p105 = por %p103, %p104
      %p106 = scmp.ne.s32.totalorder %s98, %s100
      %p107 = scmp.eq.s32.totalorder %s29, 1
      %p108 = por %p106, %p107
      %p109 = scmp.ne.s32.totalorder %s100, %s101
      %p110 = scmp.eq.s32.totalorder %s29, 0
      %p111 = por %p109, %p110
      %p112 = scmp.ne.s32.totalorder %s100, %s101
      %p113 = scmp.eq.s32.totalorder %s30, 1
      %p114 = por %p112, %p113
      %p116 = scmp.ne.s32.totalorder %s101, %s115
      %p117 = scmp.eq.s32.totalorder %s30, 0
      %p118 = por %p116, %p117
      %s120 = sadd.s32 %s119, 1
      %p123 = scmp.eq.s32.totalorder %s24, 1
      %p124 = scmp.ne.s32.totalorder %s119, %s121
      %p125 = scmp.eq.s32.totalorder %s24, 0
      %p126 = por %p124, %p125
      %p127 = scmp.ne.s32.totalorder %s119, %s121
      %p128 = scmp.eq.s32.totalorder %s29, 1
      %p129 = por %p127, %p128
      %p130 = scmp.ne.s32.totalorder %s121, %s122
      %p131 = scmp.eq.s32.totalorder %s29, 0
      %p132 = por %p130, %p131
      %p133 = scmp.ne.s32.totalorder %s121, %s122
      %p134 = scmp.eq.s32.totalorder %s30, 1
      %p135 = por %p133, %p134
      %p137 = scmp.ne.s32.totalorder %s122, %s136
      %p138 = scmp.eq.s32.totalorder %s30, 0
      %p139 = por %p137, %p138
      %s141 = sadd.s32 %s140, 1
      %p144 = scmp.eq.s32.totalorder %s24, 1
      %p145 = scmp.ne.s32.totalorder %s140, %s142
      %p146 = scmp.eq.s32.totalorder %s24, 0
      %p147 = por %p145, %p146
      %p148 = scmp.ne.s32.totalorder %s140, %s142
      %p149 = scmp.eq.s32.totalorder %s29, 1
      %p150 = por %p148, %p149
      %p151 = scmp.ne.s32.totalorder %s142, %s143
      %p152 = scmp.eq.s32.totalorder %s29, 0
      %p153 = por %p151, %p152
      %p154 = scmp.ne.s32.totalorder %s142, %s143
      %p155 = scmp.eq.s32.totalorder %s30, 1
      %p156 = por %p154, %p155
      %p158 = scmp.ne.s32.totalorder %s143, %s157
      %p159 = scmp.eq.s32.totalorder %s30, 0
      %p160 = por %p158, %p159
      %s162 = sadd.s32 %s161, 1
      %p165 = scmp.eq.s32.totalorder %s24, 1
      %p166 = scmp.ne.s32.totalorder %s161, %s163
      %p167 = scmp.eq.s32.totalorder %s24, 0
      %p168 = por %p166, %p167
      %p169 = scmp.ne.s32.totalorder %s161, %s163
      %p170 = scmp.eq.s32.totalorder %s29, 1
      %p171 = por %p169, %p170
      %p172 = scmp.ne.s32.totalorder %s163, %s164
      %p173 = scmp.eq.s32.totalorder %s29, 0
      %p174 = por %p172, %p173
      %p175 = scmp.ne.s32.totalorder %s163, %s164
      %p176 = scmp.eq.s32.totalorder %s30, 1
      %p177 = por %p175, %p176
      %p179 = scmp.ne.s32.totalorder %s164, %s178
      %p180 = scmp.eq.s32.totalorder %s30, 0
      %p181 = por %p179, %p180
      %s183 = sadd.s32 %s182, 1
      %p186 = scmp.eq.s32.totalorder %s24, 1
      %p187 = scmp.ne.s32.totalorder %s182, %s184
      %p188 = scmp.eq.s32.totalorder %s24, 0
      %p189 = por %p187, %p188
      %p190 = scmp.ne.s32.totalorder %s182, %s184
      %p191 = scmp.eq.s32.totalorder %s29, 1
      %p192 = por %p190, %p191
      %p193 = scmp.ne.s32.totalorder %s184, %s185
      %p194 = scmp.eq.s32.totalorder %s29, 0
      %p195 = por %p193, %p194
      %p196 = scmp.ne.s32.totalorder %s184, %s185
      %p197 = scmp.eq.s32.totalorder %s30, 1
      %p198 = por %p196, %p197
      %p200 = scmp.ne.s32.totalorder %s185, %s199
      %p201 = scmp.eq.s32.totalorder %s30, 0
      %p202 = por %p200, %p201
      %s204 = sadd.s32 %s203, 1
      %p207 = scmp.eq.s32.totalorder %s24, 1
      %p208 = scmp.ne.s32.totalorder %s203, %s205
      %p209 = scmp.eq.s32.totalorder %s24, 0
      %p210 = por %p208, %p209
      %p211 = scmp.ne.s32.totalorder %s203, %s205
      %p212 = scmp.eq.s32.totalorder %s29, 1
      %p213 = por %p211, %p212
      %p214 = scmp.ne.s32.totalorder %s205, %s206
      %p215 = scmp.eq.s32.totalorder %s29, 0
      %p216 = por %p214, %p215
      %p217 = scmp.ne.s32.totalorder %s205, %s206
      %p218 = scmp.eq.s32.totalorder %s30, 1
      %p219 = por %p217, %p218
      %p221 = scmp.ne.s32.totalorder %s206, %s220
      %p222 = scmp.eq.s32.totalorder %s30, 0
      %p223 = por %p221, %p222
      %s224 = ssub.s32 %s31, %s43
      %s225 = ssub.s32 %s32, %s39
      %s226 = sor.u32 %s224, %s225
      %p227 = scmp.eq.s32.totalorder %s226, 0
      %s229 = sadd.s32 %s228, 1
      %s230 = scalar_select %p227, %s228, %s229
      %p233 = pneg %p227
      %p234 = scmp.eq.s32.totalorder %s24, 1
      %p235 = por %p233, %p234
      %p236 = scmp.ne.s32.totalorder %s228, %s231
      %p237 = scmp.eq.s32.totalorder %s24, 0
      %p238 = por %p236, %p237
      %p239 = scmp.ne.s32.totalorder %s228, %s231
      %p240 = scmp.eq.s32.totalorder %s29, 1
      %p241 = por %p239, %p240
      %p242 = scmp.ne.s32.totalorder %s231, %s232
      %p243 = scmp.eq.s32.totalorder %s29, 0
      %p244 = por %p242, %p243
      %p245 = scmp.ne.s32.totalorder %s231, %s232
      %p246 = scmp.eq.s32.totalorder %s30, 1
      %p247 = por %p245, %p246
      %p249 = scmp.ne.s32.totalorder %s232, %s248
      %p250 = scmp.eq.s32.totalorder %s30, 0
      %p251 = por %p249, %p250
      %p252 = scmp.le.s32.totalorder 1, %s24
      %p253 = scmp.lt.s32.totalorder %s24, 3
      %p254 = pnand %p252, %p253
      %p255 = pneg %p254
      // Predicated region
      $region9: #{tpu_custom_call.1} parent=5 // pred_check
        _
      $region10: #{tpu_custom_call.1} parent=5 // pred_check_branch
        %257 = sbr.rel (%p254) target = $region12
      $region11: #{tpu_custom_call.1} parent=5 // pred_region
        %s258 = ssub.s32 %s24, 1
        // Predicated region
        $region13: #{tpu_custom_call.1} parent=11 // pred_check
          %p259 = pneg %p111
        $region14: #{tpu_custom_call.1} parent=11 // pred_check_branch
          %261 = sbr.rel (%p259) target = $region16
        $region15: #{tpu_custom_call.1} parent=11 // pred_region
          %s263 = ssub.s32 256, 256
          %264 = vsyncadd [#allocation6], %s263
          %s265 = sshll.u32 [#allocation7], 4
          %s266 = int_to_ptr.vmem [resolvable:$true] %s265
          %271 = dma.hbm_to_vmem [thread:$0]  %s2, 256, %s266, [#allocation6], 64, 64, 4
        $region16: #{tpu_custom_call.1} parent=11 // pred_fallthru
          _
        // Predicated region
        $region17: #{tpu_custom_call.1} parent=11 // pred_check
          %p272 = pneg %p132
        $region18: #{tpu_custom_call.1} parent=11 // pred_check_branch
          %274 = sbr.rel (%p272) target = $region20
        $region19: #{tpu_custom_call.1} parent=11 // pred_region
          _
        $region20: #{tpu_custom_call.1} parent=11 // pred_fallthru
          _
        // Predicated region
        $region21: #{tpu_custom_call.1} parent=11 // pred_check
          %p275 = pneg %p153
        $region22: #{tpu_custom_call.1} parent=11 // pred_check_branch
          %277 = sbr.rel (%p275) target = $region24
        $region23: #{tpu_custom_call.1} parent=11 // pred_region
          %s279 = ssub.s32 256, 256
          %280 = vsyncadd [#allocation9], %s279
          %s281 = sshll.u32 [#allocation8], 4
          %s282 = int_to_ptr.vmem [resolvable:$true] %s281
          %287 = dma.hbm_to_vmem [thread:$0]  %s4, 256, %s282, [#allocation9], 64, 64, 4
        $region24: #{tpu_custom_call.1} parent=11 // pred_fallthru
          _
        // Predicated region
        $region25: #{tpu_custom_call.1} parent=11 // pred_check
          %p288 = pneg %p174
        $region26: #{tpu_custom_call.1} parent=11 // pred_check_branch
          %290 = sbr.rel (%p288) target = $region28
        $region27: #{tpu_custom_call.1} parent=11 // pred_region
          _
        $region28: #{tpu_custom_call.1} parent=11 // pred_fallthru
          _
        // Predicated region
        $region29: #{tpu_custom_call.1} parent=11 // pred_check
          %p291 = pneg %p195
        $region30: #{tpu_custom_call.1} parent=11 // pred_check_branch
          %293 = sbr.rel (%p291) target = $region32
        $region31: #{tpu_custom_call.1} parent=11 // pred_region
          _
        $region32: #{tpu_custom_call.1} parent=11 // pred_fallthru
          _
        // Predicated region
        $region33: #{tpu_custom_call.1} parent=11 // pred_check
          %p294 = pneg %p216
        $region34: #{tpu_custom_call.1} parent=11 // pred_check_branch
          %296 = sbr.rel (%p294) target = $region36
        $region35: #{tpu_custom_call.1} parent=11 // pred_region
          _
        $region36: #{tpu_custom_call.1} parent=11 // pred_fallthru
          _
      $region12: #{tpu_custom_call.1} parent=5 // pred_fallthru
        _
      %p297 = scmp.lt.s32.totalorder %s24, 2
      // Predicated region
      $region37: #{tpu_custom_call.1} parent=5 // pred_check
        %p298 = pneg %p297
      $region38: #{tpu_custom_call.1} parent=5 // pred_check_branch
        %300 = sbr.rel (%p298) target = $region40
      $region39: #{tpu_custom_call.1} parent=5 // pred_region
        // Predicated region
        $region41: #{tpu_custom_call.1} parent=39 // pred_check
          %p301 = pneg %p58
        $region42: #{tpu_custom_call.1} parent=39 // pred_check_branch
          %303 = sbr.rel (%p301) target = $region44
        $region43: #{tpu_custom_call.1} parent=39 // pred_region
          %s304 = sand.u32 %s48, 1
          %s305 = scalar_lea.sflag [#allocation3], %s304
          %s306 = sand.u32 %s48, 1
          %s307 = smul.addr %s306, 16
          %s308 = scalar_lea.vmem [#allocation2], %s307
          %s309 = smul.u32 2, %s31
          %s311 = ssub.s32 256, 256
          %312 = vsyncadd %s305, %s311
          %s313 = sadd.s32 %s32, %s309
          %s314 = smul.addr %s313, 128
          %s315 = scalar_lea.hbm %s0, %s314
          %s316 = sshll.u32 %s308, 4
          %s317 = int_to_ptr.vmem [resolvable:$true] %s316
          %322 = dma.hbm_to_vmem [thread:$0]  %s315, 256, %s317, %s305, 128, 128, 8
        $region44: #{tpu_custom_call.1} parent=39 // pred_fallthru
          _
        // Predicated region
        $region45: #{tpu_custom_call.1} parent=39 // pred_check
          %p323 = pneg %p84
        $region46: #{tpu_custom_call.1} parent=39 // pred_check_branch
          %325 = sbr.rel (%p323) target = $region48
        $region47: #{tpu_custom_call.1} parent=39 // pred_region
          %s326 = sand.u32 %s24, 1
          %s327 = scalar_lea.sflag [#allocation6], %s326
          %s328 = sand.u32 %s74, 1
          %s329 = smul.addr %s328, 16
          %s330 = scalar_lea.vmem [#allocation5], %s329
          %s331 = smul.u32 2, %s31
          %s333 = ssub.s32 256, 256
          %334 = vsyncadd %s327, %s333
          %s335 = smul.addr %s331, 128
          %s336 = scalar_lea.hbm %s1, %s335
          %s337 = sshll.u32 %s330, 4
          %s338 = int_to_ptr.vmem [resolvable:$true] %s337
          %343 = dma.hbm_to_vmem [thread:$0]  %s336, 256, %s338, %s327, 128, 128, 8
        $region48: #{tpu_custom_call.1} parent=39 // pred_fallthru
          _
      $region40: #{tpu_custom_call.1} parent=5 // pred_fallthru
        _
      %p344 = scmp.le.s32.totalorder 1, %s24
      %p345 = scmp.lt.s32.totalorder %s24, 3
      %p346 = pnand %p344, %p345
      %p347 = pneg %p346
      // Predicated region
      $region49: #{tpu_custom_call.1} parent=5 // pred_check
        _
      $region50: #{tpu_custom_call.1} parent=5 // pred_check_branch
        %349 = sbr.rel (%p346) target = $region52
      $region51: #{tpu_custom_call.1} parent=5 // pred_region
        %s350 = ssub.s32 %s24, 1
        %s351 = sand.u32 %s51, 1
        %s352 = scalar_lea.sflag [#allocation3], %s351
        %s353 = sand.u32 %s51, 1
        %s354 = smul.addr %s353, 16
        %s355 = scalar_lea.vmem [#allocation2], %s354
        // Predicated region
        $region53: #{tpu_custom_call.1} parent=51 // pred_check
          %p356 = pneg %p64
        $region54: #{tpu_custom_call.1} parent=51 // pred_check_branch
          %358 = sbr.rel (%p356) target = $region56
        $region55: #{tpu_custom_call.1} parent=51 // pred_region
          %359 = dma.done %s352, 256
        $region56: #{tpu_custom_call.1} parent=51 // pred_fallthru
          _
        %s360 = sand.u32 %s29, 1
        %s361 = scalar_lea.sflag [#allocation6], %s360
        %s362 = sand.u32 %s77, 1
        %s363 = smul.addr %s362, 16
        %s364 = scalar_lea.vmem [#allocation5], %s363
        // Predicated region
        $region57: #{tpu_custom_call.1} parent=51 // pred_check
          %p365 = pneg %p90
        $region58: #{tpu_custom_call.1} parent=51 // pred_check_branch
          %367 = sbr.rel (%p365) target = $region60
        $region59: #{tpu_custom_call.1} parent=51 // pred_region
          %368 = dma.done %s361, 256
        $region60: #{tpu_custom_call.1} parent=51 // pred_fallthru
          _
        // Predicated region
        $region61: #{tpu_custom_call.1} parent=51 // pred_check
          %p369 = pneg %p111
        $region62: #{tpu_custom_call.1} parent=51 // pred_check_branch
          %371 = sbr.rel (%p369) target = $region64
        $region63: #{tpu_custom_call.1} parent=51 // pred_region
          %372 = dma.done [#allocation6], 256
        $region64: #{tpu_custom_call.1} parent=51 // pred_fallthru
          _
        // Predicated region
        $region65: #{tpu_custom_call.1} parent=51 // pred_check
          %p373 = pneg %p153
        $region66: #{tpu_custom_call.1} parent=51 // pred_check_branch
          %375 = sbr.rel (%p373) target = $region68
        $region67: #{tpu_custom_call.1} parent=51 // pred_region
          %376 = dma.done [#allocation9], 256
        $region68: #{tpu_custom_call.1} parent=51 // pred_fallthru
          _
        %s377 = sand.u32 %s51, 1
        %s378 = scalar_lea.sflag [#allocation3], %s377
        %s379 = sand.u32 %s51, 1
        %s380 = smul.addr %s379, 16
        %s381 = scalar_lea.vmem [#allocation2], %s380
        %p382 = pneg %p64
        %p383 = pneg %p61
        %s384 = sand.u32 %s29, 1
        %s385 = scalar_lea.sflag [#allocation6], %s384
        %s386 = sand.u32 %s77, 1
        %s387 = smul.addr %s386, 16
        %s388 = scalar_lea.vmem [#allocation5], %s387
        %p389 = pneg %p90
        %p390 = pneg %p87
        %p391 = pneg %p111
        %p392 = pneg %p108
        %p393 = pneg %p132
        %p394 = pneg %p129
        %p395 = pneg %p153
        %p396 = pneg %p150
        %p397 = pneg %p174
        %p398 = pneg %p171
        %p399 = pneg %p195
        %p400 = pneg %p192
        %p401 = pneg %p216
        %p402 = pneg %p213
        %p403 = pneg %p244
        %p404 = pneg %p241
        %s405 = sand.u32 %s231, 1
        %s406 = scalar_lea.sflag [#allocation4], %s405
        %s407 = sand.u32 %s231, 1
        %s408 = smul.addr %s407, 16
        %s409 = scalar_lea.vmem [#allocation10], %s408
        %s410 = smul.u32 2, %s33
        %s411 = smul.u32 2, %s33
        %s412 = smul.u32 2, %s33
        %v414 = vld [vmem:[%s355] sm:$0xff]
        %v415 = vld [vmem:[%s355 + $0x8] sm:$0xff]
        %v416 = vpack.c.bf16 %v415, %v414
        %v417 = vld [vmem:[%s364] sm:$0xff]
        %v418 = vld [vmem:[%s364 + $0x8] sm:$0xff]
        %v419 = vpack.c.bf16 %v418, %v417
        %v420 = vld [vmem:[#allocation7] sm:$0xf]
        %v421 = vld [vmem:[#allocation7 + $0x4] sm:$0xf]
        %v422 = vld [vmem:[#allocation7 + $0x8] sm:$0xf]
        %v423 = vld [vmem:[#allocation7 + $0xc] sm:$0xf]
        %v424 = vld [vmem:[%s3] sm:$0x1]
        %v426 = vlaneseq
        %v427 = vshrl.u32 %v426, 7
        %v428 = vsub.s32 0, %v427
        %v429 = vrot.slane %v424, %v428
        %v435 = vunpack.c.l.b16 %v420
        %v436 = vunpack.c.l.b16 %v421
        %v437 = vunpack.c.l.b16 %v422
        %v438 = vunpack.c.l.b16 %v423
        %v439 = vpack.c.b16 %v436, %v435
        %v440 = vpack.c.b16 %v438, %v437
        %vm443 = vcmask 261120
        %v445 = vsel %vm443, %v416, 0
        %447 = vmatprep.subr.bf16.mxu0 0
        %448 = vmatpush1.bf16.msra.mxu0 %v439
        %449 = vmatprep.subr.bf16.mxu0 0
        %450 = vmatpush1.bf16.msra.mxu0 %v440
        %451 = vmatprep.subr.bf16.mxu0 0
        %452 = vmatpush1.bf16.msra.mxu0 0
        %453 = vmatprep.subr.bf16.mxu0 0
        %454 = vmatpush1.bf16.msra.mxu0 0
        %455 = vmatprep.subr.bf16.mxu0 0
        %456 = vmatpush1.bf16.msra.mxu0 0
        %457 = vmatprep.subr.bf16.mxu0 0
        %458 = vmatpush1.bf16.msra.mxu0 0
        %459 = vmatprep.subr.bf16.mxu0 0
        %460 = vmatpush1.bf16.msra.mxu0 0
        %461 = vmatprep.subr.bf16.mxu0 0
        %462 = vmatpush1.bf16.msra.mxu0 0
        %463 = vmatprep.subr.bf16.mxu0 0
        %464 = vmatpush1.bf16.msra.mxu0 0
        %465 = vmatprep.subr.bf16.mxu0 0
        %466 = vmatpush1.bf16.msra.mxu0 0
        %467 = vmatprep.subr.bf16.mxu0 0
        %468 = vmatpush1.bf16.msra.mxu0 0
        %469 = vmatprep.subr.bf16.mxu0 0
        %470 = vmatpush1.bf16.msra.mxu0 0
        %471 = vmatprep.subr.bf16.mxu0 0
        %472 = vmatpush1.bf16.msra.mxu0 0
        %473 = vmatprep.subr.bf16.mxu0 0
        %474 = vmatpush1.bf16.msra.mxu0 0
        %475 = vmatprep.subr.bf16.mxu0 0
        %476 = vmatpush1.bf16.msra.mxu0 0
        %477 = vmatprep.subr.bf16.mxu0 0
        %478 = vmatpush1.bf16.msra.mxu0 0
        %479 = vmatprep.mubr.bf16.mxu0 0
        %480 = vmatmul.mubr.bf16.gmra.mrb[0].mxu0 %v445
        %v481 = vpop.f32.mrb[0].mxu0
        %v482 = vadd.f32 %v429, %v481
        %v483 = vpop.f32.mrb[0].mxu0
        %v484 = vpop.f32.mrb[0].mxu0
        %v485 = vadd.f32 %v429, %v484
        %v486 = vpop.f32.mrb[0].mxu0
        %487 = vdwg.mxu0
        %v488 = vld [vmem:[#allocation8] sm:$0xf]
        %v489 = vld [vmem:[#allocation8 + $0x4] sm:$0xf]
        %v490 = vld [vmem:[#allocation8 + $0x8] sm:$0xf]
        %v491 = vld [vmem:[#allocation8 + $0xc] sm:$0xf]
        %v492 = vld [vmem:[%s5] sm:$0x1]
        %v494 = vlaneseq
        %v495 = vshrl.u32 %v494, 7
        %v496 = vsub.s32 0, %v495
        %v497 = vrot.slane %v492, %v496
        %v503 = vunpack.c.l.b16 %v488
        %v504 = vunpack.c.l.b16 %v489
        %v505 = vunpack.c.l.b16 %v490
        %v506 = vunpack.c.l.b16 %v491
        %v507 = vpack.c.b16 %v504, %v503
        %v508 = vpack.c.b16 %v506, %v505
        %v512 = vsel %vm443, %v419, 0
        %514 = vmatprep.subr.bf16.mxu0 0
        %515 = vmatpush1.bf16.msra.mxu0 %v507
        %516 = vmatprep.subr.bf16.mxu0 0
        %517 = vmatpush1.bf16.msra.mxu0 %v508
        %518 = vmatprep.subr.bf16.mxu0 0
        %519 = vmatpush1.bf16.msra.mxu0 0
        %520 = vmatprep.subr.bf16.mxu0 0
        %521 = vmatpush1.bf16.msra.mxu0 0
        %522 = vmatprep.subr.bf16.mxu0 0
        %523 = vmatpush1.bf16.msra.mxu0 0
        %524 = vmatprep.subr.bf16.mxu0 0
        %525 = vmatpush1.bf16.msra.mxu0 0
        %526 = vmatprep.subr.bf16.mxu0 0
        %527 = vmatpush1.bf16.msra.mxu0 0
        %528 = vmatprep.subr.bf16.mxu0 0
        %529 = vmatpush1.bf16.msra.mxu0 0
        %530 = vmatprep.subr.bf16.mxu0 0
        %531 = vmatpush1.bf16.msra.mxu0 0
        %532 = vmatprep.subr.bf16.mxu0 0
        %533 = vmatpush1.bf16.msra.mxu0 0
        %534 = vmatprep.subr.bf16.mxu0 0
        %535 = vmatpush1.bf16.msra.mxu0 0
        %536 = vmatprep.subr.bf16.mxu0 0
        %537 = vmatpush1.bf16.msra.mxu0 0
        %538 = vmatprep.subr.bf16.mxu0 0
        %539 = vmatpush1.bf16.msra.mxu0 0
        %540 = vmatprep.subr.bf16.mxu0 0
        %541 = vmatpush1.bf16.msra.mxu0 0
        %542 = vmatprep.subr.bf16.mxu0 0
        %543 = vmatpush1.bf16.msra.mxu0 0
        %544 = vmatprep.subr.bf16.mxu0 0
        %545 = vmatpush1.bf16.msra.mxu0 0
        %546 = vmatprep.mubr.bf16.mxu0 0
        %547 = vmatmul.mubr.bf16.gmra.mrb[0].mxu0 %v512
        %v548 = vpop.f32.mrb[0].mxu0
        %v549 = vadd.f32 %v497, %v548
        %v550 = vpop.f32.mrb[0].mxu0
        %v551 = vpop.f32.mrb[0].mxu0
        %v552 = vadd.f32 %v497, %v551
        %v553 = vpop.f32.mrb[0].mxu0
        %554 = vdwg.mxu0
        %v555 = vpack.c.bf16 %v482, %v482
        %v556 = vpack.c.bf16 %v485, %v485
        %v557 = vpack.c.bf16 %v549, %v549
        %v558 = vpack.c.bf16 %v552, %v552
        %v560 = vsel %vm443, %v555, 0
        %v563 = vsel %vm443, %v557, 0
        %565 = vmatprep.subr.bf16.mxu0 0
        %566 = vmatpush1.bf16.xpose.msra.mxu0 %v563
        %567 = vmatprep.subr.bf16.mxu0 0
        %568 = vmatpush1.bf16.xpose.msra.mxu0 0
        %569 = vmatprep.subr.bf16.mxu0 0
        %570 = vmatpush1.bf16.xpose.msra.mxu0 0
        %571 = vmatprep.subr.bf16.mxu0 0
        %572 = vmatpush1.bf16.xpose.msra.mxu0 0
        %573 = vmatprep.subr.bf16.mxu0 0
        %574 = vmatpush1.bf16.xpose.msra.mxu0 0
        %575 = vmatprep.subr.bf16.mxu0 0
        %576 = vmatpush1.bf16.xpose.msra.mxu0 0
        %577 = vmatprep.subr.bf16.mxu0 0
        %578 = vmatpush1.bf16.xpose.msra.mxu0 0
        %579 = vmatprep.subr.bf16.mxu0 0
        %580 = vmatpush1.bf16.xpose.msra.mxu0 0
        %581 = vmatprep.subr.bf16.mxu0 0
        %582 = vmatpush1.bf16.xpose.msra.mxu0 0
        %583 = vmatprep.subr.bf16.mxu0 0
        %584 = vmatpush1.bf16.xpose.msra.mxu0 0
        %585 = vmatprep.subr.bf16.mxu0 0
        %586 = vmatpush1.bf16.xpose.msra.mxu0 0
        %587 = vmatprep.subr.bf16.mxu0 0
        %588 = vmatpush1.bf16.xpose.msra.mxu0 0
        %589 = vmatprep.subr.bf16.mxu0 0
        %590 = vmatpush1.bf16.xpose.msra.mxu0 0
        %591 = vmatprep.subr.bf16.mxu0 0
        %592 = vmatpush1.bf16.xpose.msra.mxu0 0
        %593 = vmatprep.subr.bf16.mxu0 0
        %594 = vmatpush1.bf16.xpose.msra.mxu0 0
        %595 = vmatprep.subr.bf16.mxu0 0
        %596 = vmatpush1.bf16.xpose.msra.mxu0 0
        %597 = vmatprep.mubr.bf16.mxu0 0
        %598 = vmatmul.mubr.bf16.gmra.mrb[0].mxu0 %v560
        %v599 = vpop.f32.mrb[0].mxu0
        %v600 = vadd.f32 0.0, %v599
        %v601 = vpop.f32.mrb[0].mxu0
        %v602 = vpop.f32.mrb[0].mxu0
        %v603 = vpop.f32.mrb[0].mxu0
        %604 = vdwg.mxu0
        %v606 = vsel %vm443, %v556, 0
        %v609 = vsel %vm443, %v558, 0
        %611 = vmatprep.subr.bf16.mxu0 0
        %612 = vmatpush1.bf16.xpose.msra.mxu0 %v609
        %613 = vmatprep.subr.bf16.mxu0 0
        %614 = vmatpush1.bf16.xpose.msra.mxu0 0
        %615 = vmatprep.subr.bf16.mxu0 0
        %616 = vmatpush1.bf16.xpose.msra.mxu0 0
        %617 = vmatprep.subr.bf16.mxu0 0
        %618 = vmatpush1.bf16.xpose.msra.mxu0 0
        %619 = vmatprep.subr.bf16.mxu0 0
        %620 = vmatpush1.bf16.xpose.msra.mxu0 0
        %621 = vmatprep.subr.bf16.mxu0 0
        %622 = vmatpush1.bf16.xpose.msra.mxu0 0
        %623 = vmatprep.subr.bf16.mxu0 0
        %624 = vmatpush1.bf16.xpose.msra.mxu0 0
        %625 = vmatprep.subr.bf16.mxu0 0
        %626 = vmatpush1.bf16.xpose.msra.mxu0 0
        %627 = vmatprep.subr.bf16.mxu0 0
        %628 = vmatpush1.bf16.xpose.msra.mxu0 0
        %629 = vmatprep.subr.bf16.mxu0 0
        %630 = vmatpush1.bf16.xpose.msra.mxu0 0
        %631 = vmatprep.subr.bf16.mxu0 0
        %632 = vmatpush1.bf16.xpose.msra.mxu0 0
        %633 = vmatprep.subr.bf16.mxu0 0
        %634 = vmatpush1.bf16.xpose.msra.mxu0 0
        %635 = vmatprep.subr.bf16.mxu0 0
        %636 = vmatpush1.bf16.xpose.msra.mxu0 0
        %637 = vmatprep.subr.bf16.mxu0 0
        %638 = vmatpush1.bf16.xpose.msra.mxu0 0
        %639 = vmatprep.subr.bf16.mxu0 0
        %640 = vmatpush1.bf16.xpose.msra.mxu0 0
        %641 = vmatprep.subr.bf16.mxu0 0
        %642 = vmatpush1.bf16.xpose.msra.mxu0 0
        %643 = vmatprep.mubr.bf16.mxu0 0
        %644 = vmatmul.mubr.bf16.gmra.mrb[0].mxu0 %v606
        %v645 = vpop.f32.mrb[0].mxu0
        %v646 = vadd.f32 0.0, %v645
        %v647 = vpop.f32.mrb[0].mxu0
        %v648 = vpop.f32.mrb[0].mxu0
        %v649 = vpop.f32.mrb[0].mxu0
        %650 = vdwg.mxu0
        %v651 = vmul.f32 %v600, 0.17677669
        %v652 = vmul.f32 %v646, 0.17677669
        %vm653 = vcmask 64512
        %v654 = vsel %vm653, %v651, -inf
        %655 = vmax.xlane.f32.xlu0 %v654
        %v656 = vpop.xlane.xlu0 %655
        %v657 = vsel %vm653, %v652, -inf
        %658 = vmax.xlane.f32.xlu0 %v657
        %v659 = vpop.xlane.xlu0 %658
        %v660 = vsub.f32 %v651, %v656
        %v661 = vsub.f32 %v652, %v659
        %v662 = vmul.f32 %v660, 1.442695
        %v663 = vpow.pop %v662
        %v664 = vmul.f32 %v661, 1.442695
        %v665 = vpow.pop %v664
        %v666 = vsel %vm653, %v663, 0.0
        %667 = vadd.xlane.f32.xlu0 %v666
        %v668 = vpop.xlane.xlu0 %667
        %v669 = vsel %vm653, %v665, 0.0
        %670 = vadd.xlane.f32.xlu0 %v669
        %v671 = vpop.xlane.xlu0 %670
        %v672 = vrcp.pop %v668
        %v673 = vrcp.pop %v671
        %v674 = vmul.f32 %v663, %v672
        %v675 = vmul.f32 %v665, %v673
        %v676 = vpack.c.bf16 %v674, %v674
        %v677 = vpack.c.bf16 %v675, %v675
        %679 = vrot.lane.b32.xlu0 %v557, 96
        %v680 = vpop.permute.xlu0 %679
        %v682 = vsel %vm653, %v676, 0
        %vm684 = vcmask 1043456
        %v686 = vsel %vm684, %v680, 0
        %688 = vmatprep.subr.bf16.mxu0 0
        %689 = vmatpush1.bf16.msra.mxu0 %v686
        %690 = vmatprep.subr.bf16.mxu0 0
        %691 = vmatpush1.bf16.msra.mxu0 0
        %692 = vmatprep.subr.bf16.mxu0 0
        %693 = vmatpush1.bf16.msra.mxu0 0
        %694 = vmatprep.subr.bf16.mxu0 0
        %695 = vmatpush1.bf16.msra.mxu0 0
        %696 = vmatprep.subr.bf16.mxu0 0
        %697 = vmatpush1.bf16.msra.mxu0 0
        %698 = vmatprep.subr.bf16.mxu0 0
        %699 = vmatpush1.bf16.msra.mxu0 0
        %700 = vmatprep.subr.bf16.mxu0 0
        %701 = vmatpush1.bf16.msra.mxu0 0
        %702 = vmatprep.subr.bf16.mxu0 0
        %703 = vmatpush1.bf16.msra.mxu0 0
        %704 = vmatprep.subr.bf16.mxu0 0
        %705 = vmatpush1.bf16.msra.mxu0 0
        %706 = vmatprep.subr.bf16.mxu0 0
        %707 = vmatpush1.bf16.msra.mxu0 0
        %708 = vmatprep.subr.bf16.mxu0 0
        %709 = vmatpush1.bf16.msra.mxu0 0
        %710 = vmatprep.subr.bf16.mxu0 0
        %711 = vmatpush1.bf16.msra.mxu0 0
        %712 = vmatprep.subr.bf16.mxu0 0
        %713 = vmatpush1.bf16.msra.mxu0 0
        %714 = vmatprep.subr.bf16.mxu0 0
        %715 = vmatpush1.bf16.msra.mxu0 0
        %716 = vmatprep.subr.bf16.mxu0 0
        %717 = vmatpush1.bf16.msra.mxu0 0
        %718 = vmatprep.subr.bf16.mxu0 0
        %719 = vmatpush1.bf16.msra.mxu0 0
        %720 = vmatprep.mubr.bf16.mxu0 0
        %721 = vmatmul.mubr.bf16.gmra.mrb[0].mxu0 %v682
        %v722 = vpop.f32.mrb[0].mxu0
        %v723 = vadd.f32 0.0, %v722
        %v724 = vpop.f32.mrb[0].mxu0
        %v725 = vpop.f32.mrb[0].mxu0
        %v726 = vpop.f32.mrb[0].mxu0
        %727 = vdwg.mxu0
        %729 = vrot.lane.b32.xlu0 %v558, 96
        %v730 = vpop.permute.xlu0 %729
        %v732 = vsel %vm653, %v677, 0
        %v735 = vsel %vm684, %v730, 0
        %737 = vmatprep.subr.bf16.mxu0 0
        %738 = vmatpush1.bf16.msra.mxu0 %v735
        %739 = vmatprep.subr.bf16.mxu0 0
        %740 = vmatpush1.bf16.msra.mxu0 0
        %741 = vmatprep.subr.bf16.mxu0 0
        %742 = vmatpush1.bf16.msra.mxu0 0
        %743 = vmatprep.subr.bf16.mxu0 0
        %744 = vmatpush1.bf16.msra.mxu0 0
        %745 = vmatprep.subr.bf16.mxu0 0
        %746 = vmatpush1.bf16.msra.mxu0 0
        %747 = vmatprep.subr.bf16.mxu0 0
        %748 = vmatpush1.bf16.msra.mxu0 0
        %749 = vmatprep.subr.bf16.mxu0 0
        %750 = vmatpush1.bf16.msra.mxu0 0
        %751 = vmatprep.subr.bf16.mxu0 0
        %752 = vmatpush1.bf16.msra.mxu0 0
        %753 = vmatprep.subr.bf16.mxu0 0
        %754 = vmatpush1.bf16.msra.mxu0 0
        %755 = vmatprep.subr.bf16.mxu0 0
        %756 = vmatpush1.bf16.msra.mxu0 0
        %757 = vmatprep.subr.bf16.mxu0 0
        %758 = vmatpush1.bf16.msra.mxu0 0
        %759 = vmatprep.subr.bf16.mxu0 0
        %760 = vmatpush1.bf16.msra.mxu0 0
        %761 = vmatprep.subr.bf16.mxu0 0
        %762 = vmatpush1.bf16.msra.mxu0 0
        %763 = vmatprep.subr.bf16.mxu0 0
        %764 = vmatpush1.bf16.msra.mxu0 0
        %765 = vmatprep.subr.bf16.mxu0 0
        %766 = vmatpush1.bf16.msra.mxu0 0
        %767 = vmatprep.subr.bf16.mxu0 0
        %768 = vmatpush1.bf16.msra.mxu0 0
        %769 = vmatprep.mubr.bf16.mxu0 0
        %770 = vmatmul.mubr.bf16.gmra.mrb[0].mxu0 %v732
        %v771 = vpop.f32.mrb[0].mxu0
        %v772 = vadd.f32 0.0, %v771
        %v773 = vpop.f32.mrb[0].mxu0
        %v774 = vpop.f32.mrb[0].mxu0
        %v775 = vpop.f32.mrb[0].mxu0
        %776 = vdwg.mxu0
        %v777 = vpack.c.bf16 %v772, %v723
        %v778 = vld [vmem:[%s6] sm:$0xf]
        %v779 = vld [vmem:[%s6 + $0x4] sm:$0xf]
        %v780 = vld [vmem:[%s6 + $0x8] sm:$0xf]
        %v781 = vld [vmem:[%s6 + $0xc] sm:$0xf]
        %v782 = vld [vmem:[%s7] sm:$0x1]
        %v784 = vlaneseq
        %v785 = vshrl.u32 %v784, 7
        %v786 = vsub.s32 0, %v785
        %v787 = vrot.slane %v782, %v786
        %v793 = vunpack.c.l.b16 %v778
        %v794 = vunpack.c.l.b16 %v779
        %v795 = vunpack.c.l.b16 %v780
        %v796 = vunpack.c.l.b16 %v781
        %v797 = vpack.c.b16 %v794, %v793
        %v798 = vpack.c.b16 %v796, %v795
        %v802 = vsel %vm443, %v777, 0
        %804 = vmatprep.subr.bf16.mxu0 0
        %805 = vmatpush1.bf16.msra.mxu0 %v797
        %806 = vmatprep.subr.bf16.mxu0 0
        %807 = vmatpush1.bf16.msra.mxu0 %v798
        %808 = vmatprep.subr.bf16.mxu0 0
        %809 = vmatpush1.bf16.msra.mxu0 0
        %810 = vmatprep.subr.bf16.mxu0 0
        %811 = vmatpush1.bf16.msra.mxu0 0
        %812 = vmatprep.subr.bf16.mxu0 0
        %813 = vmatpush1.bf16.msra.mxu0 0
        %814 = vmatprep.subr.bf16.mxu0 0
        %815 = vmatpush1.bf16.msra.mxu0 0
        %816 = vmatprep.subr.bf16.mxu0 0
        %817 = vmatpush1.bf16.msra.mxu0 0
        %818 = vmatprep.subr.bf16.mxu0 0
        %819 = vmatpush1.bf16.msra.mxu0 0
        %820 = vmatprep.subr.bf16.mxu0 0
        %821 = vmatpush1.bf16.msra.mxu0 0
        %822 = vmatprep.subr.bf16.mxu0 0
        %823 = vmatpush1.bf16.msra.mxu0 0
        %824 = vmatprep.subr.bf16.mxu0 0
        %825 = vmatpush1.bf16.msra.mxu0 0
        %826 = vmatprep.subr.bf16.mxu0 0
        %827 = vmatpush1.bf16.msra.mxu0 0
        %828 = vmatprep.subr.bf16.mxu0 0
        %829 = vmatpush1.bf16.msra.mxu0 0
        %830 = vmatprep.subr.bf16.mxu0 0
        %831 = vmatpush1.bf16.msra.mxu0 0
        %832 = vmatprep.subr.bf16.mxu0 0
        %833 = vmatpush1.bf16.msra.mxu0 0
        %834 = vmatprep.subr.bf16.mxu0 0
        %835 = vmatpush1.bf16.msra.mxu0 0
        %836 = vmatprep.mubr.bf16.mxu0 0
        %837 = vmatmul.mubr.bf16.gmra.mrb[0].mxu0 %v802
        %v838 = vpop.f32.mrb[0].mxu0
        %v839 = vadd.f32 %v787, %v838
        %v840 = vpop.f32.mrb[0].mxu0
        %v841 = vpop.f32.mrb[0].mxu0
        %v842 = vadd.f32 %v787, %v841
        %v843 = vpop.f32.mrb[0].mxu0
        %844 = vdwg.mxu0
        %845 = vst.msk [vmem:[%s409] sm:$0xff] %vm443, %v839
        %846 = vst.msk [vmem:[%s409 + $0x8] sm:$0xff] %vm443, %v842
        %s847 = sand.u32 %s231, 1
        %s848 = scalar_lea.sflag [#allocation4], %s847
        %s849 = sand.u32 %s231, 1
        %s850 = smul.addr %s849, 16
        %s851 = scalar_lea.vmem [#allocation10], %s850
        // Predicated region
        $region69: #{tpu_custom_call.1} parent=51 // pred_check
          %p852 = pneg %p241
        $region70: #{tpu_custom_call.1} parent=51 // pred_check_branch
          %854 = sbr.rel (%p852) target = $region72
        $region71: #{tpu_custom_call.1} parent=51 // pred_region
          %s855 = smul.u32 2, %s33
          %s857 = ssub.s32 256, 256
          %858 = vsyncadd %s848, %s857
          %s859 = sadd.s32 %s34, %s855
          %s860 = smul.addr %s859, 128
          %s861 = scalar_lea.hbm %s8, %s860
          %s862 = sshll.u32 %s851, 4
          %s863 = int_to_ptr.vmem [resolvable:$true] %s862
          %868 = dma.vmem_to_hbm [thread:$0]  %s863, 256, %s861, %s848, 128, 128, 8
        $region72: #{tpu_custom_call.1} parent=51 // pred_fallthru
          _
      $region52: #{tpu_custom_call.1} parent=5 // pred_fallthru
        _
      %p869 = scmp.le.s32.totalorder 2, %s24
      // Predicated region
      $region73: #{tpu_custom_call.1} parent=5 // pred_check
        %p870 = pneg %p869
      $region74: #{tpu_custom_call.1} parent=5 // pred_check_branch
        %872 = sbr.rel (%p870) target = $region76
      $region75: #{tpu_custom_call.1} parent=5 // pred_region
        %s873 = ssub.s32 %s24, 2
        // Predicated region
        $region77: #{tpu_custom_call.1} parent=75 // pred_check
          %p874 = pneg %p247
        $region78: #{tpu_custom_call.1} parent=75 // pred_check_branch
          %876 = sbr.rel (%p874) target = $region80
        $region79: #{tpu_custom_call.1} parent=75 // pred_region
          %s877 = sand.u32 %s232, 1
          %s878 = scalar_lea.sflag [#allocation4], %s877
          %s879 = sand.u32 %s232, 1
          %s880 = smul.addr %s879, 16
          %s881 = scalar_lea.vmem [#allocation10], %s880
          %882 = dma.done %s878, 256
        $region80: #{tpu_custom_call.1} parent=75 // pred_fallthru
          _
      $region76: #{tpu_custom_call.1} parent=5 // pred_fallthru
        _
    $region6: #{tpu_custom_call.1} parent=1 // loop_footer
      %s28 = sadd.s32 1, %s24
    $region7: #{tpu_custom_call.1} parent=1 // loop_footer_branch
      %23 = sbr.rel target = $region3
    $region8: #{tpu_custom_call.1} parent=1 // loop_exit
      _
    %883 = vsyncpa [#allocation3], 1
    %s884 = scalar_lea.sflag [#allocation3], 1
    %885 = vsyncpa %s884, 1
    %886 = vsyncpa [#allocation6], 1
    %s887 = scalar_lea.sflag [#allocation6], 1
    %888 = vsyncpa %s887, 1
    %889 = vsyncpa [#allocation9], 1
    %890 = vsyncpa [#allocation4], 1
    %s891 = scalar_lea.sflag [#allocation4], 1
    %892 = vsyncpa %s891, 1

</llo_original>
